<compile_context>
chip_gen: v6e
topology: v6e:2x2x1
jax: 0.10.0
libtpu: 0.0.40
codegen_flags: <defaults>
</compile_context>

<pallas_src>
import jax
import jax.numpy as jnp
from jax.experimental import pallas as pl
from jax.experimental.pallas import tpu as pltpu

NCOL = 32              # number of input features (ncol in the original script)
N_HIDDEN_UNITS = 100   # matches the PyTorch module
BATCH = 8
LANE = 128


def _round_up(n, m):
    return ((n + m - 1) // m) * m


def _cdiv(a, b):
    return -(-a // b)


def _choose_batch_tile(B, cap):
    """Lane-dense (multiple-of-128) batch tile that tiles the batch tightly."""
    B128 = _round_up(max(B, 1), LANE)
    if B128 <= cap:
        return B128, 1                     # single tile, minimal padding
    k = _cdiv(B128, cap)                   # number of tiles
    tb = _round_up(_cdiv(B, k), LANE)      # tight tile, multiple of 128
    k = _cdiv(B, tb)
    return tb, k


def mlp_kernel(b2_ref, xT_ref, w1_ref, b1_ref, w2_ref, o_ref):
    # b2_ref: (1,) f32 scalar-prefetch operand in SMEM.
    # xT_ref: (ncol, tb) lane-dense input tile.
    # w1_ref: (Hp, ncol), b1_ref: (Hp, 1), w2_ref: (1, Hp) -- VMEM-resident.
    hT = jnp.dot(w1_ref[...], xT_ref[...],
                 preferred_element_type=jnp.float32)          # (Hp, tb) on MXU
    hT = jnp.maximum(hT + b1_ref[...], 0.0)                   # bias + ReLU on VPU
    yT = jnp.dot(w2_ref[...], hT,
                 preferred_element_type=jnp.float32)          # (1, tb) on MXU
    o_ref[...] = (yT + b2_ref[0]).astype(o_ref.dtype)         # lane-dense store


def nnet_forward(x, w1, b1, w2, b2, *, tile_cap=16384, use_bf16=False):
    """Forward pass of NNet with torch.nn.Linear parameter layout:
       w1: (H, ncol), b1: (H,), w2: (1, H), b2: (1,).  Returns (B, 1)."""
    B, ncol = x.shape
    H = w1.shape[0]
    Hp = _round_up(H, LANE)                # 100 -> 128 (exact zero padding)

    compute_dtype = jnp.bfloat16 if use_bf16 else jnp.float32

    # Parameter prep (once, in the wrapper): transposed-layout padding.
    w1_p = jnp.zeros((Hp, ncol), jnp.float32).at[:H, :].set(w1.astype(jnp.float32))
    b1_col = jnp.zeros((Hp, 1), jnp.float32).at[:H, 0].set(b1.astype(jnp.float32))
    w2_row = jnp.zeros((1, Hp), jnp.float32).at[:, :H].set(
        w2.reshape(1, H).astype(jnp.float32))
    b2_s = jnp.asarray(b2, jnp.float32).reshape((1,))

    # Tight, lane-dense batch tiling.
    tb, num_tiles = _choose_batch_tile(B, tile_cap)
    B_pad = tb * num_tiles

    xT = jnp.zeros((ncol, B_pad), jnp.float32).at[:, :B].set(
        x.astype(jnp.float32).T)
    xT = xT.astype(compute_dtype)
    w1_mat = w1_p.astype(compute_dtype)

    flops = 2 * B_pad * (ncol * Hp + Hp)
    bytes_accessed = (xT.size * xT.dtype.itemsize
                      + w1_mat.size * w1_mat.dtype.itemsize
                      + (b1_col.size + w2_row.size + b2_s.size + B_pad) * 4)

    grid_spec = pltpu.PrefetchScalarGridSpec(
        num_scalar_prefetch=1,                               # b2 lives in SMEM
        grid=(num_tiles,),
        in_specs=[
            pl.BlockSpec((ncol, tb), lambda i, b2_ref: (0, i)),  # x tile (pipelined)
            pl.BlockSpec((Hp, ncol), lambda i, b2_ref: (0, 0)),  # w1: resident
            pl.BlockSpec((Hp, 1),    lambda i, b2_ref: (0, 0)),  # b1: resident
            pl.BlockSpec((1, Hp),    lambda i, b2_ref: (0, 0)),  # w2: resident
        ],
        out_specs=pl.BlockSpec((1, tb), lambda i, b2_ref: (0, i)),  # lane-dense
    )

    out = pl.pallas_call(
        mlp_kernel,
        out_shape=jax.ShapeDtypeStruct((1, B_pad), jnp.float32),
        grid_spec=grid_spec,
        compiler_params=pltpu.CompilerParams(
            dimension_semantics=("parallel",),   # batch axis -> 2 TCs on v7x
            vmem_limit_bytes=48 * 1024 * 1024,   # headroom for tb=16384 on v5e
        ),
        cost_estimate=pl.CostEstimate(flops=flops, transcendentals=0,
                                      bytes_accessed=bytes_accessed),
    )(b2_s, xT, w1_mat, b1_col, w2_row)
    return out[0, :B].reshape(B, 1)


def reference_forward(x, w1, b1, w2, b2):
    h = jnp.maximum(x @ w1.T + b1, 0.0)
    return h @ w2.T + b2


if __name__ == "__main__":
    key = jax.random.PRNGKey(0)
    kx, k1, kb1, k2, kb2 = jax.random.split(key, 5)

    # Deterministic synthetic inputs/parameters in torch.nn.Linear layout.
    x = jax.random.normal(kx, (BATCH, NCOL), dtype=jnp.float32)
    w1 = jax.random.normal(k1, (N_HIDDEN_UNITS, NCOL), dtype=jnp.float32) * 0.1
    b1 = jax.random.normal(kb1, (N_HIDDEN_UNITS,), dtype=jnp.float32) * 0.1
    w2 = jax.random.normal(k2, (1, N_HIDDEN_UNITS), dtype=jnp.float32) * 0.1
    b2 = jax.random.normal(kb2, (1,), dtype=jnp.float32) * 0.1

    out = nnet_forward(x, w1, b1, w2, b2)
    out = jax.block_until_ready(out)

    ref = reference_forward(x, w1, b1, w2, b2)
    assert out.shape == (BATCH, 1)
    assert jnp.allclose(out, ref, atol=1e-4, rtol=1e-4), "mismatch vs reference"

    print("KERNEL_OK")
</pallas_src>

<mosaic_0001>
module attributes {stable_mosaic.version = 11 : i64} {
  func.func @mlp_kernel(%arg0: i32, %arg1: memref<1xf32, #tpu.memory_space<smem>>, %arg2: memref<32x128xf32, #tpu.memory_space<vmem>>, %arg3: memref<128x32xf32, #tpu.memory_space<vmem>>, %arg4: memref<128x1xf32, #tpu.memory_space<vmem>>, %arg5: memref<1x128xf32, #tpu.memory_space<vmem>>, %arg6: memref<1x128xf32, #tpu.memory_space<vmem>>) attributes {dimension_semantics = [#tpu.dimension_semantics<parallel>], iteration_bounds = array<i64: 1>, scalar_prefetch = 1 : i64, scratch_operands = 0 : i64, tpu.core_type = #tpu.core_type<tc>, window_params = [{transform_indices = @transform_0, window_bounds = array<i64: 32, 128>}, {pipeline_mode = #tpu.pipeline_mode<synchronous>, transform_indices = @transform_1, window_bounds = array<i64: 128, 32>}, {pipeline_mode = #tpu.pipeline_mode<synchronous>, transform_indices = @transform_2, window_bounds = array<i64: 128, 1>}, {pipeline_mode = #tpu.pipeline_mode<synchronous>, transform_indices = @transform_3, window_bounds = array<i64: 1, 128>}, {transform_indices = @transform_4, window_bounds = array<i64: 1, 128>}]} {
    %c0 = arith.constant 0 : index
    %c0_0 = arith.constant 0 : index
    %0 = vector.load %arg3[%c0, %c0_0] : memref<128x32xf32, #tpu.memory_space<vmem>>, vector<128x32xf32>
    %c0_1 = arith.constant 0 : index
    %c0_2 = arith.constant 0 : index
    %1 = vector.load %arg2[%c0_1, %c0_2] : memref<32x128xf32, #tpu.memory_space<vmem>>, vector<32x128xf32>
    %cst = arith.constant dense<0.000000e+00> : vector<128x128xf32>
    %2 = tpu.matmul %0, %1, %cst {dimension_numbers = #tpu.dot_dimension_numbers<[1], [0], [0], [1], [0, 0, 1, 1], [], []>} : vector<128x32xf32>, vector<32x128xf32>, vector<128x128xf32> -> vector<128x128xf32>
    %c0_3 = arith.constant 0 : index
    %c0_4 = arith.constant 0 : index
    %3 = vector.load %arg4[%c0_3, %c0_4] : memref<128x1xf32, #tpu.memory_space<vmem>>, vector<128x1xf32>
    %4 = vector.broadcast %3 : vector<128x1xf32> to vector<128x128xf32>
    %5 = arith.addf %2, %4 : vector<128x128xf32>
    %cst_5 = arith.constant 0.000000e+00 : f32
    %6 = vector.broadcast %cst_5 : f32 to vector<128x128xf32>
    %7 = arith.maximumf %5, %6 : vector<128x128xf32>
    %c0_6 = arith.constant 0 : index
    %c0_7 = arith.constant 0 : index
    %8 = vector.load %arg5[%c0_6, %c0_7] : memref<1x128xf32, #tpu.memory_space<vmem>>, vector<1x128xf32>
    %cst_8 = arith.constant dense<0.000000e+00> : vector<1x128xf32>
    %9 = tpu.matmul %8, %7, %cst_8 {dimension_numbers = #tpu.dot_dimension_numbers<[1], [0], [0], [1], [0, 0, 1, 1], [], []>} : vector<1x128xf32>, vector<128x128xf32>, vector<1x128xf32> -> vector<1x128xf32>
    %c0_9 = arith.constant 0 : index
    %10 = memref.load %arg1[%c0_9] : memref<1xf32, #tpu.memory_space<smem>>
    %11 = vector.broadcast %10 : f32 to vector<1x128xf32>
    %12 = arith.addf %9, %11 : vector<1x128xf32>
    %c0_10 = arith.constant 0 : index
    %c0_11 = arith.constant 0 : index
    %13 = vector.load %arg6[%c0_10, %c0_11] : memref<1x128xf32, #tpu.memory_space<vmem>>, vector<1x128xf32>
    tpu.vector_store %arg6[%c0_10, %c0_11], %12 {strides = array<i32>} : memref<1x128xf32, #tpu.memory_space<vmem>>, vector<1x128xf32>,
    return
  }
  func.func @transform_0(%arg0: i32, %arg1: memref<1xf32, #tpu.memory_space<smem>>) -> (i32, i32) {
    %c0_i32 = arith.constant 0 : i32
    %c0_i32_0 = arith.constant 0 : i32
    return %c0_i32, %arg0 : i32, i32
  }
  func.func @transform_1(%arg0: i32, %arg1: memref<1xf32, #tpu.memory_space<smem>>) -> (i32, i32) {
    %c0_i32 = arith.constant 0 : i32
    %c0_i32_0 = arith.constant 0 : i32
    %c0_i32_1 = arith.constant 0 : i32
    return %c0_i32, %c0_i32_0 : i32, i32
  }
  func.func @transform_2(%arg0: i32, %arg1: memref<1xf32, #tpu.memory_space<smem>>) -> (i32, i32) {
    %c0_i32 = arith.constant 0 : i32
    %c0_i32_0 = arith.constant 0 : i32
    %c0_i32_1 = arith.constant 0 : i32
    return %c0_i32, %c0_i32_0 : i32, i32
  }
  func.func @transform_3(%arg0: i32, %arg1: memref<1xf32, #tpu.memory_space<smem>>) -> (i32, i32) {
    %c0_i32 = arith.constant 0 : i32
    %c0_i32_0 = arith.constant 0 : i32
    %c0_i32_1 = arith.constant 0 : i32
    return %c0_i32, %c0_i32_0 : i32, i32
  }
  func.func @transform_4(%arg0: i32, %arg1: memref<1xf32, #tpu.memory_space<smem>>) -> (i32, i32) {
    %c0_i32 = arith.constant 0 : i32
    %c0_i32_0 = arith.constant 0 : i32
    return %c0_i32, %arg0 : i32, i32
  }
}

</mosaic_0001>

<llo_original>
// kernel: tpu_custom_call.1
$region0: #{tpu_custom_call.1}
  #allocation0 [shape = 'u32[]', space=smem, size = 0x4, offset = 0x4, fixed_abs, tag = 'smem constant byte address 0x4 - core index']
  #allocation1 [shape = 'u32[144,128]{1,0:T(1,128)}', space=vmem, size = 0x12000, scoped, tag = 'internal scratch']
  #allocation2 [shape = 's32[1]{0}', space=sflag, size = 0x4, scoped, tag = 'scoped memory for tpu_custom_call.1']
  #allocation3 [shape = 'f32[1]{0:T(128)S(6)}', space=smem, size = 0x200, scoped, tag = 'prefetched SMEM operand 0']
  %s0 = inlined_call_operand.<no memory space> [shape: f32[1], index: 0, kind: input, shape index: {}]
  %s1 = inlined_call_operand.vmem [shape: f32[32,128], index: 1, kind: input, shape index: {}]
  %s2 = inlined_call_operand.vmem [shape: f32[128,32], index: 2, kind: input, shape index: {}]
  %s3 = inlined_call_operand.vmem [shape: f32[128,1], index: 3, kind: input, shape index: {}]
  %s4 = inlined_call_operand.vmem [shape: f32[1,128], index: 4, kind: input, shape index: {}]
  %s5 = inlined_call_operand.hbm [shape: f32[1,128], index: 5, kind: output, shape index: {}]
  %s6 = sld [smem:[#allocation0]]
  $region26: #{tpu_custom_call.1} parent=0
    _
  %s8 = ssub.s32 1, %s6
  %s9 = scalar_select 0, %s8, %s6
  %10 = sst [smem:[#allocation3]] %s0
  $region1: #{tpu_custom_call.1} parent=0
    #allocation4 [shape = 'u8[512]{0}', space=vmem, size = 0x400, scoped, tag = 'output window, operand 0, single buffered']
    #allocation5 [shape = 's32[1]{0}', space=sflag, size = 0x4, scoped, tag = 'scoped memory for tpu_custom_call.1']
    %11 = vsyncpa [#allocation5], 0
    // Predicated region
    $region2: #{tpu_custom_call.1} parent=1 // pred_check
      _
    $region3: #{tpu_custom_call.1} parent=1 // pred_check_branch
      %13 = sbr.rel (0) target = $region5
    $region4: #{tpu_custom_call.1} parent=1 // pred_region
      _
    $region5: #{tpu_custom_call.1} parent=1 // pred_fallthru
      _
    // Predicated region
    $region6: #{tpu_custom_call.1} parent=1 // pred_check
      _
    $region7: #{tpu_custom_call.1} parent=1 // pred_check_branch
      %15 = sbr.rel (0) target = $region9
    $region8: #{tpu_custom_call.1} parent=1 // pred_region
      _
    $region9: #{tpu_custom_call.1} parent=1 // pred_fallthru
      _
    // Predicated region
    $region10: #{tpu_custom_call.1} parent=1 // pred_check
      _
    $region11: #{tpu_custom_call.1} parent=1 // pred_check_branch
      %17 = sbr.rel (0) target = $region13
    $region12: #{tpu_custom_call.1} parent=1 // pred_region
      _
    $region13: #{tpu_custom_call.1} parent=1 // pred_fallthru
      _
    // Predicated region
    $region14: #{tpu_custom_call.1} parent=1 // pred_check
      _
    $region15: #{tpu_custom_call.1} parent=1 // pred_check_branch
      %19 = sbr.rel (0) target = $region17
    $region16: #{tpu_custom_call.1} parent=1 // pred_region
      _
    $region17: #{tpu_custom_call.1} parent=1 // pred_fallthru
      _
    %v20 = vld [vmem:[%s2] sm:$0xff]
    %v21 = vld [vmem:[%s2 + $0x8] sm:$0xff]
    %v22 = vld [vmem:[%s2 + $0x10] sm:$0xff]
    %v23 = vld [vmem:[%s2 + $0x18] sm:$0xff]
    %v24 = vld [vmem:[%s2 + $0x20] sm:$0xff]
    %v25 = vld [vmem:[%s2 + $0x28] sm:$0xff]
    %v26 = vld [vmem:[%s2 + $0x30] sm:$0xff]
    %v27 = vld [vmem:[%s2 + $0x38] sm:$0xff]
    %v28 = vld [vmem:[%s2 + $0x40] sm:$0xff]
    %v29 = vld [vmem:[%s2 + $0x48] sm:$0xff]
    %v30 = vld [vmem:[%s2 + $0x50] sm:$0xff]
    %v31 = vld [vmem:[%s2 + $0x58] sm:$0xff]
    %v32 = vld [vmem:[%s2 + $0x60] sm:$0xff]
    %v33 = vld [vmem:[%s2 + $0x68] sm:$0xff]
    %v34 = vld [vmem:[%s2 + $0x70] sm:$0xff]
    %v35 = vld [vmem:[%s2 + $0x78] sm:$0xff]
    %v36 = vld [vmem:[%s1] sm:$0xff]
    %v37 = vld [vmem:[%s1 + $0x8] sm:$0xff]
    %v38 = vld [vmem:[%s1 + $0x10] sm:$0xff]
    %v39 = vld [vmem:[%s1 + $0x18] sm:$0xff]
    %v40 = vld [vmem:[%s3] sm:$0xff]
    %v41 = vld [vmem:[%s3 + $0x8] sm:$0xff]
    %v42 = vld [vmem:[%s3 + $0x10] sm:$0xff]
    %v43 = vld [vmem:[%s3 + $0x18] sm:$0xff]
    %v44 = vld [vmem:[%s3 + $0x20] sm:$0xff]
    %v45 = vld [vmem:[%s3 + $0x28] sm:$0xff]
    %v46 = vld [vmem:[%s3 + $0x30] sm:$0xff]
    %v47 = vld [vmem:[%s3 + $0x38] sm:$0xff]
    %v48 = vld [vmem:[%s3 + $0x40] sm:$0xff]
    %v49 = vld [vmem:[%s3 + $0x48] sm:$0xff]
    %v50 = vld [vmem:[%s3 + $0x50] sm:$0xff]
    %v51 = vld [vmem:[%s3 + $0x58] sm:$0xff]
    %v52 = vld [vmem:[%s3 + $0x60] sm:$0xff]
    %v53 = vld [vmem:[%s3 + $0x68] sm:$0xff]
    %v54 = vld [vmem:[%s3 + $0x70] sm:$0xff]
    %v55 = vld [vmem:[%s3 + $0x78] sm:$0xff]
    %57 = vset.pattern.permute.xlu0 0
    %58 = vperm.xlu0 %57, %v40
    %v59 = vpop.permute.xlu0 %58
    %62 = vset.pattern.permute.xlu0 0
    %63 = vperm.xlu0 %62, %v41
    %v64 = vpop.permute.xlu0 %63
    %67 = vset.pattern.permute.xlu0 0
    %68 = vperm.xlu0 %67, %v42
    %v69 = vpop.permute.xlu0 %68
    %72 = vset.pattern.permute.xlu0 0
    %73 = vperm.xlu0 %72, %v43
    %v74 = vpop.permute.xlu0 %73
    %77 = vset.pattern.permute.xlu0 0
    %78 = vperm.xlu0 %77, %v44
    %v79 = vpop.permute.xlu0 %78
    %82 = vset.pattern.permute.xlu0 0
    %83 = vperm.xlu0 %82, %v45
    %v84 = vpop.permute.xlu0 %83
    %87 = vset.pattern.permute.xlu0 0
    %88 = vperm.xlu0 %87, %v46
    %v89 = vpop.permute.xlu0 %88
    %92 = vset.pattern.permute.xlu0 0
    %93 = vperm.xlu0 %92, %v47
    %v94 = vpop.permute.xlu0 %93
    %97 = vset.pattern.permute.xlu0 0
    %98 = vperm.xlu0 %97, %v48
    %v99 = vpop.permute.xlu0 %98
    %102 = vset.pattern.permute.xlu0 0
    %103 = vperm.xlu0 %102, %v49
    %v104 = vpop.permute.xlu0 %103
    %107 = vset.pattern.permute.xlu0 0
    %108 = vperm.xlu0 %107, %v50
    %v109 = vpop.permute.xlu0 %108
    %112 = vset.pattern.permute.xlu0 0
    %113 = vperm.xlu0 %112, %v51
    %v114 = vpop.permute.xlu0 %113
    %117 = vset.pattern.permute.xlu0 0
    %118 = vperm.xlu0 %117, %v52
    %v119 = vpop.permute.xlu0 %118
    %122 = vset.pattern.permute.xlu0 0
    %123 = vperm.xlu0 %122, %v53
    %v124 = vpop.permute.xlu0 %123
    %127 = vset.pattern.permute.xlu0 0
    %128 = vperm.xlu0 %127, %v54
    %v129 = vpop.permute.xlu0 %128
    %132 = vset.pattern.permute.xlu0 0
    %133 = vperm.xlu0 %132, %v55
    %v134 = vpop.permute.xlu0 %133
    %vm136 = vcmask 261120
    %v138 = vsel %vm136, %v20, 0
    %v141 = vsel %vm136, %v21, 0
    %v144 = vsel %vm136, %v22, 0
    %v147 = vsel %vm136, %v23, 0
    %v150 = vsel %vm136, %v24, 0
    %v153 = vsel %vm136, %v25, 0
    %v156 = vsel %vm136, %v26, 0
    %v159 = vsel %vm136, %v27, 0
    %v162 = vsel %vm136, %v28, 0
    %v165 = vsel %vm136, %v29, 0
    %v168 = vsel %vm136, %v30, 0
    %v171 = vsel %vm136, %v31, 0
    %v174 = vsel %vm136, %v32, 0
    %v177 = vsel %vm136, %v33, 0
    %v180 = vsel %vm136, %v34, 0
    %v183 = vsel %vm136, %v35, 0
    %185 = vmatprep.subr.mxu0 0.0
    %186 = vmatpush1.msra.mxu0 0.0
    %187 = vmatprep.subr.mxu0 0.0
    %188 = vmatpush1.msra.mxu0 0.0
    %189 = vmatprep.subr.mxu0 0.0
    %190 = vmatpush1.msra.mxu0 0.0
    %191 = vmatprep.subr.mxu0 0.0
    %192 = vmatpush1.msra.mxu0 0.0
    %193 = vmatprep.subr.mxu0 0.0
    %194 = vmatpush1.msra.mxu0 0.0
    %195 = vmatprep.subr.mxu0 0.0
    %196 = vmatpush1.msra.mxu0 0.0
    %197 = vmatprep.subr.mxu0 0.0
    %198 = vmatpush1.msra.mxu0 0.0
    %199 = vmatprep.subr.mxu0 0.0
    %200 = vmatpush1.msra.mxu0 0.0
    %201 = vmatprep.subr.mxu0 0.0
    %202 = vmatpush1.msra.mxu0 0.0
    %203 = vmatprep.subr.mxu0 0.0
    %204 = vmatpush1.msra.mxu0 0.0
    %205 = vmatprep.subr.mxu0 0.0
    %206 = vmatpush1.msra.mxu0 0.0
    %207 = vmatprep.subr.mxu0 0.0
    %208 = vmatpush1.msra.mxu0 0.0
    %209 = vmatprep.subr.mxu0 0.0
    %210 = vmatpush1.msra.mxu0 %v39
    %211 = vmatprep.subr.mxu0 0.0
    %212 = vmatpush1.msra.mxu0 %v38
    %213 = vmatprep.subr.mxu0 0.0
    %214 = vmatpush1.msra.mxu0 %v37
    %215 = vmatprep.subr.mxu0 0.0
    %216 = vmatpush1.msra.mxu0 %v36
    %217 = vmatprep.subr.mxu0 0.0
    %218 = vmatpush2.msra.mxu0 0.0
    %219 = vmatprep.subr.mxu0 0.0
    %220 = vmatpush2.msra.mxu0 0.0
    %221 = vmatprep.subr.mxu0 0.0
    %222 = vmatpush2.msra.mxu0 0.0
    %223 = vmatprep.subr.mxu0 0.0
    %224 = vmatpush2.msra.mxu0 0.0
    %225 = vmatprep.subr.mxu0 0.0
    %226 = vmatpush2.msra.mxu0 0.0
    %227 = vmatprep.subr.mxu0 0.0
    %228 = vmatpush2.msra.mxu0 0.0
    %229 = vmatprep.subr.mxu0 0.0
    %230 = vmatpush2.msra.mxu0 0.0
    %231 = vmatprep.subr.mxu0 0.0
    %232 = vmatpush2.msra.mxu0 0.0
    %233 = vmatprep.subr.mxu0 0.0
    %234 = vmatpush2.msra.mxu0 0.0
    %235 = vmatprep.subr.mxu0 0.0
    %236 = vmatpush2.msra.mxu0 0.0
    %237 = vmatprep.subr.mxu0 0.0
    %238 = vmatpush2.msra.mxu0 0.0
    %239 = vmatprep.subr.mxu0 0.0
    %240 = vmatpush2.msra.mxu0 0.0
    %241 = vmatprep.subr.mxu0 0.0
    %242 = vmatpush2.msra.mxu0 0.0
    %243 = vmatprep.subr.mxu0 0.0
    %244 = vmatpush2.msra.mxu0 0.0
    %245 = vmatprep.subr.mxu0 0.0
    %246 = vmatpush2.msra.mxu0 0.0
    %247 = vmatprep.subr.mxu0 0.0
    %248 = vmatpush2.msra.mxu0 0.0
    %249 = vmatprep.mubr.f32.mxu0 0.0
    %250 = vmatmul.mubr.f32.gmra.mxu0 %v138
    %v251 = vpop.f32.mrf.mxu0
    %v252 = vadd.f32 %v59, %v251
    %v253 = vpop.f32.mrf.mxu0
    %254 = vmatprep.mubr.f32.mxu0 0.0
    %255 = vmatmul.mubr.f32.gmra.mxu0 %v141
    %v256 = vpop.f32.mrf.mxu0
    %v257 = vadd.f32 %v64, %v256
    %v258 = vpop.f32.mrf.mxu0
    %259 = vmatprep.mubr.f32.mxu0 0.0
    %260 = vmatmul.mubr.f32.gmra.mxu0 %v144
    %v261 = vpop.f32.mrf.mxu0
    %v262 = vadd.f32 %v69, %v261
    %v263 = vpop.f32.mrf.mxu0
    %264 = vmatprep.mubr.f32.mxu0 0.0
    %265 = vmatmul.mubr.f32.gmra.mxu0 %v147
    %v266 = vpop.f32.mrf.mxu0
    %v267 = vadd.f32 %v74, %v266
    %v268 = vpop.f32.mrf.mxu0
    %269 = vmatprep.mubr.f32.mxu0 0.0
    %270 = vmatmul.mubr.f32.gmra.mxu0 %v150
    %v271 = vpop.f32.mrf.mxu0
    %v272 = vadd.f32 %v79, %v271
    %v273 = vpop.f32.mrf.mxu0
    %274 = vmatprep.mubr.f32.mxu0 0.0
    %275 = vmatmul.mubr.f32.gmra.mxu0 %v153
    %v276 = vpop.f32.mrf.mxu0
    %v277 = vadd.f32 %v84, %v276
    %v278 = vpop.f32.mrf.mxu0
    %279 = vmatprep.mubr.f32.mxu0 0.0
    %280 = vmatmul.mubr.f32.gmra.mxu0 %v156
    %v281 = vpop.f32.mrf.mxu0
    %v282 = vadd.f32 %v89, %v281
    %v283 = vpop.f32.mrf.mxu0
    %284 = vmatprep.mubr.f32.mxu0 0.0
    %285 = vmatmul.mubr.f32.gmra.mxu0 %v159
    %v286 = vpop.f32.mrf.mxu0
    %v287 = vadd.f32 %v94, %v286
    %v288 = vpop.f32.mrf.mxu0
    %289 = vmatprep.mubr.f32.mxu0 0.0
    %290 = vmatmul.mubr.f32.gmra.mxu0 %v162
    %v291 = vpop.f32.mrf.mxu0
    %v292 = vadd.f32 %v99, %v291
    %v293 = vpop.f32.mrf.mxu0
    %294 = vmatprep.mubr.f32.mxu0 0.0
    %295 = vmatmul.mubr.f32.gmra.mxu0 %v165
    %v296 = vpop.f32.mrf.mxu0
    %v297 = vadd.f32 %v104, %v296
    %v298 = vpop.f32.mrf.mxu0
    %299 = vmatprep.mubr.f32.mxu0 0.0
    %300 = vmatmul.mubr.f32.gmra.mxu0 %v168
    %v301 = vpop.f32.mrf.mxu0
    %v302 = vadd.f32 %v109, %v301
    %v303 = vpop.f32.mrf.mxu0
    %304 = vmatprep.mubr.f32.mxu0 0.0
    %305 = vmatmul.mubr.f32.gmra.mxu0 %v171
    %v306 = vpop.f32.mrf.mxu0
    %v307 = vadd.f32 %v114, %v306
    %v308 = vpop.f32.mrf.mxu0
    %309 = vmatprep.mubr.f32.mxu0 0.0
    %310 = vmatmul.mubr.f32.gmra.mxu0 %v174
    %v311 = vpop.f32.mrf.mxu0
    %v312 = vadd.f32 %v119, %v311
    %v313 = vpop.f32.mrf.mxu0
    %314 = vmatprep.mubr.f32.mxu0 0.0
    %315 = vmatmul.mubr.f32.gmra.mxu0 %v177
    %v316 = vpop.f32.mrf.mxu0
    %v317 = vadd.f32 %v124, %v316
    %v318 = vpop.f32.mrf.mxu0
    %319 = vmatprep.mubr.f32.mxu0 0.0
    %320 = vmatmul.mubr.f32.gmra.mxu0 %v180
    %v321 = vpop.f32.mrf.mxu0
    %v322 = vadd.f32 %v129, %v321
    %v323 = vpop.f32.mrf.mxu0
    %324 = vmatprep.mubr.f32.mxu0 0.0
    %325 = vmatmul.mubr.f32.gmra.mxu0 %v183
    %v326 = vpop.f32.mrf.mxu0
    %v327 = vadd.f32 %v134, %v326
    %v328 = vpop.f32.mrf.mxu0
    %329 = vdwg.mxu0
    %v330 = vmax.f32 %v252, 0.0
    %v331 = vmax.f32 %v257, 0.0
    %v332 = vmax.f32 %v262, 0.0
    %v333 = vmax.f32 %v267, 0.0
    %v334 = vmax.f32 %v272, 0.0
    %v335 = vmax.f32 %v277, 0.0
    %v336 = vmax.f32 %v282, 0.0
    %v337 = vmax.f32 %v287, 0.0
    %v338 = vmax.f32 %v292, 0.0
    %v339 = vmax.f32 %v297, 0.0
    %v340 = vmax.f32 %v302, 0.0
    %v341 = vmax.f32 %v307, 0.0
    %v342 = vmax.f32 %v312, 0.0
    %v343 = vmax.f32 %v317, 0.0
    %v344 = vmax.f32 %v322, 0.0
    %v345 = vmax.f32 %v327, 0.0
    %v346 = vld [vmem:[%s4] sm:$0x1]
    %s347 = sld [smem:[#allocation3]]
    %v348 = vstv %s347
    %349 = vmatprep.subr.mxu0 0.0
    %350 = vmatpush1.msra.mxu0 %v345
    %351 = vmatprep.subr.mxu0 0.0
    %352 = vmatpush1.msra.mxu0 %v344
    %353 = vmatprep.subr.mxu0 0.0
    %354 = vmatpush1.msra.mxu0 %v343
    %355 = vmatprep.subr.mxu0 0.0
    %356 = vmatpush1.msra.mxu0 %v342
    %357 = vmatprep.subr.mxu0 0.0
    %358 = vmatpush1.msra.mxu0 %v341
    %359 = vmatprep.subr.mxu0 0.0
    %360 = vmatpush1.msra.mxu0 %v340
    %361 = vmatprep.subr.mxu0 0.0
    %362 = vmatpush1.msra.mxu0 %v339
    %363 = vmatprep.subr.mxu0 0.0
    %364 = vmatpush1.msra.mxu0 %v338
    %365 = vmatprep.subr.mxu0 0.0
    %366 = vmatpush1.msra.mxu0 %v337
    %367 = vmatprep.subr.mxu0 0.0
    %368 = vmatpush1.msra.mxu0 %v336
    %369 = vmatprep.subr.mxu0 0.0
    %370 = vmatpush1.msra.mxu0 %v335
    %371 = vmatprep.subr.mxu0 0.0
    %372 = vmatpush1.msra.mxu0 %v334
    %373 = vmatprep.subr.mxu0 0.0
    %374 = vmatpush1.msra.mxu0 %v333
    %375 = vmatprep.subr.mxu0 0.0
    %376 = vmatpush1.msra.mxu0 %v332
    %377 = vmatprep.subr.mxu0 0.0
    %378 = vmatpush1.msra.mxu0 %v331
    %379 = vmatprep.subr.mxu0 0.0
    %380 = vmatpush1.msra.mxu0 %v330
    %381 = vmatprep.subr.mxu0 0.0
    %382 = vmatpush2.msra.mxu0 0.0
    %383 = vmatprep.subr.mxu0 0.0
    %384 = vmatpush2.msra.mxu0 0.0
    %385 = vmatprep.subr.mxu0 0.0
    %386 = vmatpush2.msra.mxu0 0.0
    %387 = vmatprep.subr.mxu0 0.0
    %388 = vmatpush2.msra.mxu0 0.0
    %389 = vmatprep.subr.mxu0 0.0
    %390 = vmatpush2.msra.mxu0 0.0
    %391 = vmatprep.subr.mxu0 0.0
    %392 = vmatpush2.msra.mxu0 0.0
    %393 = vmatprep.subr.mxu0 0.0
    %394 = vmatpush2.msra.mxu0 0.0
    %395 = vmatprep.subr.mxu0 0.0
    %396 = vmatpush2.msra.mxu0 0.0
    %397 = vmatprep.subr.mxu0 0.0
    %398 = vmatpush2.msra.mxu0 0.0
    %399 = vmatprep.subr.mxu0 0.0
    %400 = vmatpush2.msra.mxu0 0.0
    %401 = vmatprep.subr.mxu0 0.0
    %402 = vmatpush2.msra.mxu0 0.0
    %403 = vmatprep.subr.mxu0 0.0
    %404 = vmatpush2.msra.mxu0 0.0
    %405 = vmatprep.subr.mxu0 0.0
    %406 = vmatpush2.msra.mxu0 0.0
    %407 = vmatprep.subr.mxu0 0.0
    %408 = vmatpush2.msra.mxu0 0.0
    %409 = vmatprep.subr.mxu0 0.0
    %410 = vmatpush2.msra.mxu0 0.0
    %411 = vmatprep.subr.mxu0 0.0
    %412 = vmatpush2.msra.mxu0 0.0
    %413 = vmatprep.mubr.f32.mxu0 0.0
    %414 = vmatmul.mubr.f32.gmra.mxu0 %v346
    %v415 = vpop.f32.mrf.mxu0
    %v416 = vadd.f32 %v348, %v415
    %v417 = vpop.f32.mrf.mxu0
    %418 = vdwg.mxu0
    %419 = vst [vmem:[#allocation4] sm:$0x1] %v416
    // Predicated region
    $region18: #{tpu_custom_call.1} parent=1 // pred_check
      _
    $region19: #{tpu_custom_call.1} parent=1 // pred_check_branch
      %421 = sbr.rel (0) target = $region21
    $region20: #{tpu_custom_call.1} parent=1 // pred_region
      %s423 = ssub.s32 16, 16
      %424 = vsyncadd [#allocation5], %s423
      %s426 = sshll.u32 [#allocation4], 4
      %s427 = int_to_ptr.vmem [resolvable:$true] %s426
      %429 = dma.vmem_to_hbm [thread:$0]  %s427, 16, %s5, [#allocation5]
    $region21: #{tpu_custom_call.1} parent=1 // pred_fallthru
      _
    // Predicated region
    $region22: #{tpu_custom_call.1} parent=1 // pred_check
      _
    $region23: #{tpu_custom_call.1} parent=1 // pred_check_branch
      %431 = sbr.rel (0) target = $region25
    $region24: #{tpu_custom_call.1} parent=1 // pred_region
      %432 = dma.done [#allocation5], 16
    $region25: #{tpu_custom_call.1} parent=1 // pred_fallthru
      _
    %433 = vsyncpa [#allocation5], 1

</llo_original>
